<compile_context>
chip_gen: v6e
topology: v6e:2x2x1
jax: 0.10.0
libtpu: 0.0.40
codegen_flags: <defaults>
</compile_context>

<pallas_src>
import functools

import jax
import jax.numpy as jnp
from jax.experimental import pallas as pl
from jax.experimental.pallas import tpu as pltpu


def _dice_partial_kernel(score_ref, target_ref, acc_ref, *,
                         n_classes, softmax, n_rows, ts, mask_rows):
    """Accumulates per-class partial sums for one batch-block.

    score_ref : (Bt, C, TS, 128) class scores (any float dtype)
    target_ref: (Bt, TS, 128)    signed-int labels, -100 = ignore
    acc_ref   : (3, C, 128)      f32 output block, resident across the pixel
                grid axis: [0]=intersect, [1]=y_sum, [2]=z_sum. The final
                lane reduce + dice combine happen in the JAX wrapper.
    """
    rt = pl.program_id(1)

    @pl.when(rt == 0)
    def _init():
        acc_ref[...] = jnp.zeros_like(acc_ref)

    x = score_ref[...].astype(jnp.float32)          # (Bt, C, TS, 128)
    tgt = target_ref[...].astype(jnp.int32)         # (Bt, TS, 128)

    if mask_rows:
        # Ragged last pixel tile: out-of-range rows hold garbage -> force them
        # to the ignore label so every contribution below selects 0.
        # (This branch is statically removed whenever TS divides R.)
        row = rt * ts + jax.lax.broadcasted_iota(jnp.int32, tgt.shape, 1)
        tgt = jnp.where(row < n_rows, tgt, -100)

    if softmax:
        m = jnp.max(x, axis=1, keepdims=True)
        e = jnp.exp(x - m)
        den = jnp.sum(e, axis=1, keepdims=True)
        # EUP reciprocal; ~1e-3 relative deviation from exact softmax.
        x = e * pl.reciprocal(den, approx=True)

    valid = tgt != -100                             # (Bt, TS, 128)

    # Per-class select + reduce, fully unrolled (C is small & static). No
    # float one-hot is materialized: the compare feeds the selects directly.
    for c in range(n_classes):
        xc = x[:, c]                                # (Bt, TS, 128)
        hit = tgt == c                              # -100 never matches a class
        inter = jnp.where(hit, xc, 0.0)
        ysum = jnp.where(hit, 1.0, 0.0)
        zsum = jnp.where(valid, xc * xc, 0.0)
        acc_ref[0, c:c + 1, :] += inter.sum(axis=0).sum(axis=0, keepdims=True)
        acc_ref[1, c:c + 1, :] += ysum.sum(axis=0).sum(axis=0, keepdims=True)
        acc_ref[2, c:c + 1, :] += zsum.sum(axis=0).sum(axis=0, keepdims=True)


def _pick_tiles(B, C, R, score_isz, target_isz, budget):
    """Choose (batch_fold Bt, pixel_row_tile TS) for (Bt, C, TS, 128) blocks."""
    ts_align = max(8, 8 * (4 // score_isz), 8 * (4 // target_isz))
    row_bytes = 128 * (C * score_isz + target_isz)   # one 128-px row, one batch
    img_bytes = R * row_bytes

    if img_bytes <= budget:
        # Whole image per batch row fits the budget: fold batches to fatten each
        # grid step, but keep >= 2 batch blocks when B >= 2 so both v7x
        # TensorCores get work along the "parallel" axis.
        bt_cap = max(1, int(min(8, budget // img_bytes, max(1, B // 2))))
        bt = max(d for d in range(1, bt_cap + 1) if B % d == 0)
        return bt, R

    # Tile the (R, 128) pixel-row axis; prefer a tile that divides R exactly so
    # the ragged-tail mask compiles away.
    cap = min(R, max(ts_align, (budget // row_bytes) // ts_align * ts_align))
    best = 0
    d = ts_align
    while d <= cap:
        if R % d == 0:
            best = d
        d += ts_align
    ts = best if best >= max(ts_align, cap // 2) else cap
    return 1, ts


def dice_loss(inputs, target, n_classes, weight=None, softmax=False,
              max_block_bytes=None):
    """Pallas implementation of DiceLoss.forward.

    inputs: (B, C, H, W) float -- class scores / probabilities (NCHW)
    target: (B, H, W)    int   -- labels in [0, n_classes) or -100 (ignore)
    """
    B, C, H, W = inputs.shape
    assert C == n_classes, f"Predict C={C} & n_classes={n_classes} mismatch"
    assert target.shape == (B, H, W)
    HW = H * W

    # Keep narrow signed-int labels narrow (the cast to i32 happens in-kernel).
    if not jnp.issubdtype(target.dtype, jnp.signedinteger):
        target = target.astype(jnp.int32)

    # Pack the pixel axis into a sublane-dense (R, 128) view so (TS, 128) tiles
    # fill whole vregs even when C < 8. Free reshape whenever 128 | H*W.
    score = inputs.reshape(B, C, HW)
    tgt = target.reshape(B, HW)
    if HW % 128 != 0:
        # Rare ragged case: one padded copy; labels padded with -100 (ignored),
        # scores with 0 (never contribute through the selects).
        pad = (-HW) % 128
        score = jnp.pad(score, ((0, 0), (0, 0), (0, pad)))
        tgt = jnp.pad(tgt, ((0, 0), (0, pad)), constant_values=-100)
    R = score.shape[-1] // 128
    score = score.reshape(B, C, R, 128)
    tgt = tgt.reshape(B, R, 128)

    # Per-block byte budget: large enough to amortize the ~0.35us grid-step
    # overhead, small enough that double-buffered inputs + f32 intermediates fit
    # every generation's VMEM (64 MiB on v7x, 128 MiB on v5e/v6e).
    try:
        vmem_cap = int(pltpu.get_tpu_info().vmem_capacity_bytes)
    except Exception:
        vmem_cap = 64 * 1024 * 1024
    budget = max(2 << 20, min(vmem_cap // 10, 12 << 20))
    if max_block_bytes is not None:
        budget = int(max_block_bytes)

    s_isz = score.dtype.itemsize
    t_isz = tgt.dtype.itemsize
    bt, ts = _pick_tiles(B, C, R, s_isz, t_isz, budget)
    nbb = B // bt                        # bt always divides B
    nrt = (R + ts - 1) // ts
    mask_rows = (R % ts) != 0

    blk_bytes = bt * ts * 128 * (C * s_isz + t_isz)
    vmem_limit = int(min(vmem_cap * 0.85,
                         max(32 << 20, 6 * blk_bytes + (16 << 20))))

    kernel = functools.partial(
        _dice_partial_kernel, n_classes=n_classes, softmax=softmax,
        n_rows=R, ts=ts, mask_rows=mask_rows)

    parts = pl.pallas_call(
        kernel,
        out_shape=jax.ShapeDtypeStruct((nbb, 3, C, 128), jnp.float32),
        grid_spec=pltpu.PrefetchScalarGridSpec(
            num_scalar_prefetch=0,
            grid=(nbb, nrt),
            in_specs=[
                pl.BlockSpec((bt, C, ts, 128), lambda bb, rt: (bb, 0, rt, 0)),
                pl.BlockSpec((bt, ts, 128), lambda bb, rt: (bb, rt, 0)),
            ],
            out_specs=pl.BlockSpec((None, 3, C, 128),
                                   lambda bb, rt: (bb, 0, 0, 0)),
        ),
        compiler_params=pltpu.CompilerParams(
            dimension_semantics=("parallel", "arbitrary"),
            vmem_limit_bytes=vmem_limit),
    )(score, tgt)

    # Tiny epilogue in plain JAX: global sums, dice per class, weighting, mean.
    sums = jnp.sum(parts, axis=(0, 3))              # (3, C)
    if weight is None:
        weight = [1.0] * n_classes
    w = jnp.asarray(weight, dtype=jnp.float32).reshape(n_classes)
    smooth = 1e-5
    dice = 1.0 - (2.0 * sums[0] + smooth) / (sums[2] + sums[1] + smooth)
    return jnp.sum(dice * w) / n_classes


def dice_loss_ref(inputs, target, n_classes, weight=None, softmax=False):
    """Pure-JAX reference mirroring the PyTorch module semantics."""
    if softmax:
        inputs = jax.nn.softmax(inputs.astype(jnp.float32), axis=1)
    if weight is None:
        weight = [1.0] * n_classes
    smooth = 1e-5
    valid = target != -100
    loss = 0.0
    for i in range(n_classes):
        s = inputs[:, i].astype(jnp.float32)
        t = jnp.where(valid, (target == i).astype(jnp.float32), 0.0)
        intersect = jnp.sum(s * t)
        y_sum = jnp.sum(t)
        z_sum = jnp.sum(jnp.where(valid, s * s, 0.0))
        loss += (1.0 - (2.0 * intersect + smooth) /
                 (z_sum + y_sum + smooth)) * weight[i]
    return loss / n_classes


if __name__ == "__main__":
    n_classes = 4
    key = jax.random.PRNGKey(0)
    ks = jax.random.split(key, 9)

    # Case 1: softmax path + ignore labels, HW multiple of 128 (packed layout),
    # B=2 -> two parallel batch blocks, single pixel tile.
    B, C, H, W = 2, n_classes, 16, 16
    x1 = jax.random.normal(ks[0], (B, C, H, W), dtype=jnp.float32)
    t1 = jax.random.randint(ks[1], (B, H, W), 0, n_classes, dtype=jnp.int32)
    t1 = jnp.where(jax.random.uniform(ks[2], (B, H, W)) < 0.1, -100, t1)
    out1 = jax.block_until_ready(dice_loss(x1, t1, n_classes, softmax=True))
    ref1 = dice_loss_ref(x1, t1, n_classes, softmax=True)
    assert jnp.allclose(out1, ref1, rtol=5e-3, atol=1e-4), (out1, ref1)

    # Case 2: HW not a multiple of 128 (padded view), class weights, batch
    # folding (B=4 -> Bt=2), no softmax.
    B2, H2, W2 = 4, 15, 15
    w2 = [0.4, 0.3, 0.2, 0.1]
    x2 = jax.random.uniform(ks[3], (B2, n_classes, H2, W2), dtype=jnp.float32)
    t2 = jax.random.randint(ks[4], (B2, H2, W2), 0, n_classes, dtype=jnp.int32)
    t2 = jnp.where(jax.random.uniform(ks[5], (B2, H2, W2)) < 0.1, -100, t2)
    out2 = jax.block_until_ready(
        dice_loss(x2, t2, n_classes, weight=w2, softmax=False))
    ref2 = dice_loss_ref(x2, t2, n_classes, weight=w2, softmax=False)
    assert jnp.allclose(out2, ref2, rtol=5e-3, atol=1e-4), (out2, ref2)

    # Case 3: forced-small blocks -> multi-tile pixel grid (R=20, TS=8) with a
    # ragged last tile and cross-step accumulation, softmax on.
    B3, H3, W3 = 2, 32, 80
    x3 = jax.random.normal(ks[6], (B3, n_classes, H3, W3), dtype=jnp.float32)
    t3 = jax.random.randint(ks[7], (B3, H3, W3), 0, n_classes, dtype=jnp.int32)
    t3 = jnp.where(jax.random.uniform(ks[8], (B3, H3, W3)) < 0.1, -100, t3)
    out3 = jax.block_until_ready(
        dice_loss(x3, t3, n_classes, softmax=True,
                  max_block_bytes=8 * 128 * (n_classes * 4 + 4)))
    ref3 = dice_loss_ref(x3, t3, n_classes, softmax=True)
    assert jnp.allclose(out3, ref3, rtol=5e-3, atol=1e-4), (out3, ref3)

    print("KERNEL_OK")
</pallas_src>

<mosaic_0001>
module attributes {stable_mosaic.version = 11 : i64} {
  func.func @_dice_partial_kernel(%arg0: i32, %arg1: i32, %arg2: memref<1x4x2x128xf32, #tpu.memory_space<vmem>>, %arg3: memref<1x2x128xi32, #tpu.memory_space<vmem>>, %arg4: memref<1x3x4x128xf32, #tpu.memory_space<vmem>>) attributes {dimension_semantics = [#tpu.dimension_semantics<parallel>, #tpu.dimension_semantics<arbitrary>], iteration_bounds = array<i64: 2, 1>, scalar_prefetch = 0 : i64, scratch_operands = 0 : i64, tpu.core_type = #tpu.core_type<tc>, window_params = [{transform_indices = @transform_0, window_bounds = array<i64: 1, 4, 2, 128>}, {transform_indices = @transform_1, window_bounds = array<i64: 1, 2, 128>}, {transform_indices = @transform_2, window_bounds = array<i64: 1, 3, 4, 128>}]} {
    %c0_i32 = arith.constant 0 : i32
    %0 = arith.cmpi eq, %arg1, %c0_i32 : i32
    %1 = arith.extui %0 : i1 to i32
    %c0_i32_0 = arith.constant 0 : i32
    %2 = arith.cmpi ne, %1, %c0_i32_0 : i32
    scf.if %2 {
      %cst_142 = arith.constant 0.000000e+00 : f32
      %173 = vector.broadcast %cst_142 : f32 to vector<3x4x128xf32>
      %c0_143 = arith.constant 0 : index
      %c0_144 = arith.constant 0 : index
      %c0_145 = arith.constant 0 : index
      %c0_146 = arith.constant 0 : index
      %174 = vector.load %arg4[%c0_143, %c0_144, %c0_145, %c0_146] : memref<1x3x4x128xf32, #tpu.memory_space<vmem>>, vector<1x3x4x128xf32>
      %175 = vector.shape_cast %174 : vector<1x3x4x128xf32> to vector<3x4x128xf32>
      %176 = vector.shape_cast %173 : vector<3x4x128xf32> to vector<1x3x4x128xf32>
      tpu.vector_store %arg4[%c0_143, %c0_144, %c0_145, %c0_146], %176 {strides = array<i32>} : memref<1x3x4x128xf32, #tpu.memory_space<vmem>>, vector<1x3x4x128xf32>,
    } else {
    }
    %c0 = arith.constant 0 : index
    %c0_1 = arith.constant 0 : index
    %c0_2 = arith.constant 0 : index
    %c0_3 = arith.constant 0 : index
    %3 = vector.load %arg2[%c0, %c0_1, %c0_2, %c0_3] : memref<1x4x2x128xf32, #tpu.memory_space<vmem>>, vector<1x4x2x128xf32>
    %c0_4 = arith.constant 0 : index
    %c0_5 = arith.constant 0 : index
    %c0_6 = arith.constant 0 : index
    %4 = vector.load %arg3[%c0_4, %c0_5, %c0_6] : memref<1x2x128xi32, #tpu.memory_space<vmem>>, vector<1x2x128xi32>
    %cst = arith.constant dense<0xFF800000> : vector<1x2x128xf32>
    %5 = vector.multi_reduction <maximumf>, %3, %cst [1] : vector<1x4x2x128xf32> to vector<1x2x128xf32>
    %6 = vector.shape_cast %5 : vector<1x2x128xf32> to vector<1x1x2x128xf32>
    %7 = vector.broadcast %6 : vector<1x1x2x128xf32> to vector<1x4x2x128xf32>
    %8 = arith.subf %3, %7 : vector<1x4x2x128xf32>
    %9 = math.exp %8 : vector<1x4x2x128xf32>
    %cst_7 = arith.constant dense<0.000000e+00> : vector<1x2x128xf32>
    %10 = vector.multi_reduction <add>, %9, %cst_7 [1] : vector<1x4x2x128xf32> to vector<1x2x128xf32>
    %11 = vector.shape_cast %10 : vector<1x2x128xf32> to vector<1x1x2x128xf32>
    %12 = tpu.reciprocal %11 {approx = true} : vector<1x1x2x128xf32> -> vector<1x1x2x128xf32>
    %13 = vector.broadcast %12 : vector<1x1x2x128xf32> to vector<1x4x2x128xf32>
    %14 = arith.mulf %9, %13 : vector<1x4x2x128xf32>
    %c-100_i32 = arith.constant -100 : i32
    %15 = vector.broadcast %c-100_i32 : i32 to vector<1x2x128xi32>
    %16 = arith.cmpi ne, %4, %15 : vector<1x2x128xi32>
    %17 = vector.extract_strided_slice %14 {offsets = [0, 0, 0, 0], sizes = [1, 1, 2, 128], strides = [1, 1, 1, 1]} : vector<1x4x2x128xf32> to vector<1x1x2x128xf32>
    %18 = vector.shape_cast %17 : vector<1x1x2x128xf32> to vector<1x2x128xf32>
    %c0_i32_8 = arith.constant 0 : i32
    %19 = vector.broadcast %c0_i32_8 : i32 to vector<1x2x128xi32>
    %20 = arith.cmpi eq, %4, %19 : vector<1x2x128xi32>
    %cst_9 = arith.constant 0.000000e+00 : f32
    %21 = vector.broadcast %cst_9 : f32 to vector<1x2x128xf32>
    %22 = arith.select %20, %18, %21 : vector<1x2x128xi1>, vector<1x2x128xf32>
    %cst_10 = arith.constant 1.000000e+00 : f32
    %cst_11 = arith.constant 0.000000e+00 : f32
    %23 = vector.broadcast %cst_10 : f32 to vector<1x2x128xf32>
    %24 = vector.broadcast %cst_11 : f32 to vector<1x2x128xf32>
    %25 = arith.select %20, %23, %24 : vector<1x2x128xi1>, vector<1x2x128xf32>
    %26 = arith.mulf %18, %18 : vector<1x2x128xf32>
    %cst_12 = arith.constant 0.000000e+00 : f32
    %27 = vector.broadcast %cst_12 : f32 to vector<1x2x128xf32>
    %28 = arith.select %16, %26, %27 : vector<1x2x128xi1>, vector<1x2x128xf32>
    %c0_13 = arith.constant 0 : index
    %c0_14 = arith.constant 0 : index
    %c0_15 = arith.constant 0 : index
    %c0_16 = arith.constant 0 : index
    %29 = vector.load %arg4[%c0_13, %c0_14, %c0_15, %c0_16] : memref<1x3x4x128xf32, #tpu.memory_space<vmem>>, vector<1x1x1x128xf32>
    %30 = vector.shape_cast %29 : vector<1x1x1x128xf32> to vector<1x128xf32>
    %cst_17 = arith.constant dense<0.000000e+00> : vector<2x128xf32>
    %31 = vector.multi_reduction <add>, %22, %cst_17 [0] : vector<1x2x128xf32> to vector<2x128xf32>
    %cst_18 = arith.constant dense<0.000000e+00> : vector<128xf32>
    %32 = vector.multi_reduction <add>, %31, %cst_18 [0] : vector<2x128xf32> to vector<128xf32>
    %33 = vector.shape_cast %32 : vector<128xf32> to vector<1x128xf32>
    %34 = arith.addf %30, %33 : vector<1x128xf32>
    %c0_19 = arith.constant 0 : index
    %c0_20 = arith.constant 0 : index
    %c0_21 = arith.constant 0 : index
    %c0_22 = arith.constant 0 : index
    %35 = vector.load %arg4[%c0_19, %c0_20, %c0_21, %c0_22] : memref<1x3x4x128xf32, #tpu.memory_space<vmem>>, vector<1x1x1x128xf32>
    %36 = vector.shape_cast %35 : vector<1x1x1x128xf32> to vector<1x128xf32>
    %37 = vector.shape_cast %34 : vector<1x128xf32> to vector<1x1x1x128xf32>
    tpu.vector_store %arg4[%c0_19, %c0_20, %c0_21, %c0_22], %37 {strides = array<i32>} : memref<1x3x4x128xf32, #tpu.memory_space<vmem>>, vector<1x1x1x128xf32>,
    %c0_23 = arith.constant 0 : index
    %c1 = arith.constant 1 : index
    %c0_24 = arith.constant 0 : index
    %c0_25 = arith.constant 0 : index
    %38 = vector.load %arg4[%c0_23, %c1, %c0_24, %c0_25] : memref<1x3x4x128xf32, #tpu.memory_space<vmem>>, vector<1x1x1x128xf32>
    %39 = vector.shape_cast %38 : vector<1x1x1x128xf32> to vector<1x128xf32>
    %cst_26 = arith.constant dense<0.000000e+00> : vector<2x128xf32>
    %40 = vector.multi_reduction <add>, %25, %cst_26 [0] : vector<1x2x128xf32> to vector<2x128xf32>
    %cst_27 = arith.constant dense<0.000000e+00> : vector<128xf32>
    %41 = vector.multi_reduction <add>, %40, %cst_27 [0] : vector<2x128xf32> to vector<128xf32>
    %42 = vector.shape_cast %41 : vector<128xf32> to vector<1x128xf32>
    %43 = arith.addf %39, %42 : vector<1x128xf32>
    %c0_28 = arith.constant 0 : index
    %c1_29 = arith.constant 1 : index
    %c0_30 = arith.constant 0 : index
    %c0_31 = arith.constant 0 : index
    %44 = vector.load %arg4[%c0_28, %c1_29, %c0_30, %c0_31] : memref<1x3x4x128xf32, #tpu.memory_space<vmem>>, vector<1x1x1x128xf32>
    %45 = vector.shape_cast %44 : vector<1x1x1x128xf32> to vector<1x128xf32>
    %46 = vector.shape_cast %43 : vector<1x128xf32> to vector<1x1x1x128xf32>
    tpu.vector_store %arg4[%c0_28, %c1_29, %c0_30, %c0_31], %46 {strides = array<i32>} : memref<1x3x4x128xf32, #tpu.memory_space<vmem>>, vector<1x1x1x128xf32>,
    %c0_32 = arith.constant 0 : index
    %c2 = arith.constant 2 : index
    %c0_33 = arith.constant 0 : index
    %c0_34 = arith.constant 0 : index
    %47 = vector.load %arg4[%c0_32, %c2, %c0_33, %c0_34] : memref<1x3x4x128xf32, #tpu.memory_space<vmem>>, vector<1x1x1x128xf32>
    %48 = vector.shape_cast %47 : vector<1x1x1x128xf32> to vector<1x128xf32>
    %cst_35 = arith.constant dense<0.000000e+00> : vector<2x128xf32>
    %49 = vector.multi_reduction <add>, %28, %cst_35 [0] : vector<1x2x128xf32> to vector<2x128xf32>
    %cst_36 = arith.constant dense<0.000000e+00> : vector<128xf32>
    %50 = vector.multi_reduction <add>, %49, %cst_36 [0] : vector<2x128xf32> to vector<128xf32>
    %51 = vector.shape_cast %50 : vector<128xf32> to vector<1x128xf32>
    %52 = arith.addf %48, %51 : vector<1x128xf32>
    %c0_37 = arith.constant 0 : index
    %c2_38 = arith.constant 2 : index
    %c0_39 = arith.constant 0 : index
    %c0_40 = arith.constant 0 : index
    %53 = vector.load %arg4[%c0_37, %c2_38, %c0_39, %c0_40] : memref<1x3x4x128xf32, #tpu.memory_space<vmem>>, vector<1x1x1x128xf32>
    %54 = vector.shape_cast %53 : vector<1x1x1x128xf32> to vector<1x128xf32>
    %55 = vector.shape_cast %52 : vector<1x128xf32> to vector<1x1x1x128xf32>
    tpu.vector_store %arg4[%c0_37, %c2_38, %c0_39, %c0_40], %55 {strides = array<i32>} : memref<1x3x4x128xf32, #tpu.memory_space<vmem>>, vector<1x1x1x128xf32>,
    %56 = vector.extract_strided_slice %14 {offsets = [0, 1, 0, 0], sizes = [1, 1, 2, 128], strides = [1, 1, 1, 1]} : vector<1x4x2x128xf32> to vector<1x1x2x128xf32>
    %57 = vector.shape_cast %56 : vector<1x1x2x128xf32> to vector<1x2x128xf32>
    %c1_i32 = arith.constant 1 : i32
    %58 = vector.broadcast %c1_i32 : i32 to vector<1x2x128xi32>
    %59 = arith.cmpi eq, %4, %58 : vector<1x2x128xi32>
    %cst_41 = arith.constant 0.000000e+00 : f32
    %60 = vector.broadcast %cst_41 : f32 to vector<1x2x128xf32>
    %61 = arith.select %59, %57, %60 : vector<1x2x128xi1>, vector<1x2x128xf32>
    %cst_42 = arith.constant 1.000000e+00 : f32
    %cst_43 = arith.constant 0.000000e+00 : f32
    %62 = vector.broadcast %cst_42 : f32 to vector<1x2x128xf32>
    %63 = vector.broadcast %cst_43 : f32 to vector<1x2x128xf32>
    %64 = arith.select %59, %62, %63 : vector<1x2x128xi1>, vector<1x2x128xf32>
    %65 = arith.mulf %57, %57 : vector<1x2x128xf32>
    %cst_44 = arith.constant 0.000000e+00 : f32
    %66 = vector.broadcast %cst_44 : f32 to vector<1x2x128xf32>
    %67 = arith.select %16, %65, %66 : vector<1x2x128xi1>, vector<1x2x128xf32>
    %c0_45 = arith.constant 0 : index
    %c0_46 = arith.constant 0 : index
    %c1_47 = arith.constant 1 : index
    %c0_48 = arith.constant 0 : index
    %68 = vector.load %arg4[%c0_45, %c0_46, %c1_47, %c0_48] : memref<1x3x4x128xf32, #tpu.memory_space<vmem>>, vector<1x1x1x128xf32>
    %69 = vector.shape_cast %68 : vector<1x1x1x128xf32> to vector<1x128xf32>
    %cst_49 = arith.constant dense<0.000000e+00> : vector<2x128xf32>
    %70 = vector.multi_reduction <add>, %61, %cst_49 [0] : vector<1x2x128xf32> to vector<2x128xf32>
    %cst_50 = arith.constant dense<0.000000e+00> : vector<128xf32>
    %71 = vector.multi_reduction <add>, %70, %cst_50 [0] : vector<2x128xf32> to vector<128xf32>
    %72 = vector.shape_cast %71 : vector<128xf32> to vector<1x128xf32>
    %73 = arith.addf %69, %72 : vector<1x128xf32>
    %c0_51 = arith.constant 0 : index
    %c0_52 = arith.constant 0 : index
    %c1_53 = arith.constant 1 : index
    %c0_54 = arith.constant 0 : index
    %74 = vector.load %arg4[%c0_51, %c0_52, %c1_53, %c0_54] : memref<1x3x4x128xf32, #tpu.memory_space<vmem>>, vector<1x1x1x128xf32>
    %75 = vector.shape_cast %74 : vector<1x1x1x128xf32> to vector<1x128xf32>
    %76 = vector.shape_cast %73 : vector<1x128xf32> to vector<1x1x1x128xf32>
    tpu.vector_store %arg4[%c0_51, %c0_52, %c1_53, %c0_54], %76 {strides = array<i32>} : memref<1x3x4x128xf32, #tpu.memory_space<vmem>>, vector<1x1x1x128xf32>,
    %c0_55 = arith.constant 0 : index
    %c1_56 = arith.constant 1 : index
    %c1_57 = arith.constant 1 : index
    %c0_58 = arith.constant 0 : index
    %77 = vector.load %arg4[%c0_55, %c1_56, %c1_57, %c0_58] : memref<1x3x4x128xf32, #tpu.memory_space<vmem>>, vector<1x1x1x128xf32>
    %78 = vector.shape_cast %77 : vector<1x1x1x128xf32> to vector<1x128xf32>
    %cst_59 = arith.constant dense<0.000000e+00> : vector<2x128xf32>
    %79 = vector.multi_reduction <add>, %64, %cst_59 [0] : vector<1x2x128xf32> to vector<2x128xf32>
    %cst_60 = arith.constant dense<0.000000e+00> : vector<128xf32>
    %80 = vector.multi_reduction <add>, %79, %cst_60 [0] : vector<2x128xf32> to vector<128xf32>
    %81 = vector.shape_cast %80 : vector<128xf32> to vector<1x128xf32>
    %82 = arith.addf %78, %81 : vector<1x128xf32>
    %c0_61 = arith.constant 0 : index
    %c1_62 = arith.constant 1 : index
    %c1_63 = arith.constant 1 : index
    %c0_64 = arith.constant 0 : index
    %83 = vector.load %arg4[%c0_61, %c1_62, %c1_63, %c0_64] : memref<1x3x4x128xf32, #tpu.memory_space<vmem>>, vector<1x1x1x128xf32>
    %84 = vector.shape_cast %83 : vector<1x1x1x128xf32> to vector<1x128xf32>
    %85 = vector.shape_cast %82 : vector<1x128xf32> to vector<1x1x1x128xf32>
    tpu.vector_store %arg4[%c0_61, %c1_62, %c1_63, %c0_64], %85 {strides = array<i32>} : memref<1x3x4x128xf32, #tpu.memory_space<vmem>>, vector<1x1x1x128xf32>,
    %c0_65 = arith.constant 0 : index
    %c2_66 = arith.constant 2 : index
    %c1_67 = arith.constant 1 : index
    %c0_68 = arith.constant 0 : index
    %86 = vector.load %arg4[%c0_65, %c2_66, %c1_67, %c0_68] : memref<1x3x4x128xf32, #tpu.memory_space<vmem>>, vector<1x1x1x128xf32>
    %87 = vector.shape_cast %86 : vector<1x1x1x128xf32> to vector<1x128xf32>
    %cst_69 = arith.constant dense<0.000000e+00> : vector<2x128xf32>
    %88 = vector.multi_reduction <add>, %67, %cst_69 [0] : vector<1x2x128xf32> to vector<2x128xf32>
    %cst_70 = arith.constant dense<0.000000e+00> : vector<128xf32>
    %89 = vector.multi_reduction <add>, %88, %cst_70 [0] : vector<2x128xf32> to vector<128xf32>
    %90 = vector.shape_cast %89 : vector<128xf32> to vector<1x128xf32>
    %91 = arith.addf %87, %90 : vector<1x128xf32>
    %c0_71 = arith.constant 0 : index
    %c2_72 = arith.constant 2 : index
    %c1_73 = arith.constant 1 : index
    %c0_74 = arith.constant 0 : index
    %92 = vector.load %arg4[%c0_71, %c2_72, %c1_73, %c0_74] : memref<1x3x4x128xf32, #tpu.memory_space<vmem>>, vector<1x1x1x128xf32>
    %93 = vector.shape_cast %92 : vector<1x1x1x128xf32> to vector<1x128xf32>
    %94 = vector.shape_cast %91 : vector<1x128xf32> to vector<1x1x1x128xf32>
    tpu.vector_store %arg4[%c0_71, %c2_72, %c1_73, %c0_74], %94 {strides = array<i32>} : memref<1x3x4x128xf32, #tpu.memory_space<vmem>>, vector<1x1x1x128xf32>,
    %95 = vector.extract_strided_slice %14 {offsets = [0, 2, 0, 0], sizes = [1, 1, 2, 128], strides = [1, 1, 1, 1]} : vector<1x4x2x128xf32> to vector<1x1x2x128xf32>
    %96 = vector.shape_cast %95 : vector<1x1x2x128xf32> to vector<1x2x128xf32>
    %c2_i32 = arith.constant 2 : i32
    %97 = vector.broadcast %c2_i32 : i32 to vector<1x2x128xi32>
    %98 = arith.cmpi eq, %4, %97 : vector<1x2x128xi32>
    %cst_75 = arith.constant 0.000000e+00 : f32
    %99 = vector.broadcast %cst_75 : f32 to vector<1x2x128xf32>
    %100 = arith.select %98, %96, %99 : vector<1x2x128xi1>, vector<1x2x128xf32>
    %cst_76 = arith.constant 1.000000e+00 : f32
    %cst_77 = arith.constant 0.000000e+00 : f32
    %101 = vector.broadcast %cst_76 : f32 to vector<1x2x128xf32>
    %102 = vector.broadcast %cst_77 : f32 to vector<1x2x128xf32>
    %103 = arith.select %98, %101, %102 : vector<1x2x128xi1>, vector<1x2x128xf32>
    %104 = arith.mulf %96, %96 : vector<1x2x128xf32>
    %cst_78 = arith.constant 0.000000e+00 : f32
    %105 = vector.broadcast %cst_78 : f32 to vector<1x2x128xf32>
    %106 = arith.select %16, %104, %105 : vector<1x2x128xi1>, vector<1x2x128xf32>
    %c0_79 = arith.constant 0 : index
    %c0_80 = arith.constant 0 : index
    %c2_81 = arith.constant 2 : index
    %c0_82 = arith.constant 0 : index
    %107 = vector.load %arg4[%c0_79, %c0_80, %c2_81, %c0_82] : memref<1x3x4x128xf32, #tpu.memory_space<vmem>>, vector<1x1x1x128xf32>
    %108 = vector.shape_cast %107 : vector<1x1x1x128xf32> to vector<1x128xf32>
    %cst_83 = arith.constant dense<0.000000e+00> : vector<2x128xf32>
    %109 = vector.multi_reduction <add>, %100, %cst_83 [0] : vector<1x2x128xf32> to vector<2x128xf32>
    %cst_84 = arith.constant dense<0.000000e+00> : vector<128xf32>
    %110 = vector.multi_reduction <add>, %109, %cst_84 [0] : vector<2x128xf32> to vector<128xf32>
    %111 = vector.shape_cast %110 : vector<128xf32> to vector<1x128xf32>
    %112 = arith.addf %108, %111 : vector<1x128xf32>
    %c0_85 = arith.constant 0 : index
    %c0_86 = arith.constant 0 : index
    %c2_87 = arith.constant 2 : index
    %c0_88 = arith.constant 0 : index
    %113 = vector.load %arg4[%c0_85, %c0_86, %c2_87, %c0_88] : memref<1x3x4x128xf32, #tpu.memory_space<vmem>>, vector<1x1x1x128xf32>
    %114 = vector.shape_cast %113 : vector<1x1x1x128xf32> to vector<1x128xf32>
    %115 = vector.shape_cast %112 : vector<1x128xf32> to vector<1x1x1x128xf32>
    tpu.vector_store %arg4[%c0_85, %c0_86, %c2_87, %c0_88], %115 {strides = array<i32>} : memref<1x3x4x128xf32, #tpu.memory_space<vmem>>, vector<1x1x1x128xf32>,
    %c0_89 = arith.constant 0 : index
    %c1_90 = arith.constant 1 : index
    %c2_91 = arith.constant 2 : index
    %c0_92 = arith.constant 0 : index
    %116 = vector.load %arg4[%c0_89, %c1_90, %c2_91, %c0_92] : memref<1x3x4x128xf32, #tpu.memory_space<vmem>>, vector<1x1x1x128xf32>
    %117 = vector.shape_cast %116 : vector<1x1x1x128xf32> to vector<1x128xf32>
    %cst_93 = arith.constant dense<0.000000e+00> : vector<2x128xf32>
    %118 = vector.multi_reduction <add>, %103, %cst_93 [0] : vector<1x2x128xf32> to vector<2x128xf32>
    %cst_94 = arith.constant dense<0.000000e+00> : vector<128xf32>
    %119 = vector.multi_reduction <add>, %118, %cst_94 [0] : vector<2x128xf32> to vector<128xf32>
    %120 = vector.shape_cast %119 : vector<128xf32> to vector<1x128xf32>
    %121 = arith.addf %117, %120 : vector<1x128xf32>
    %c0_95 = arith.constant 0 : index
    %c1_96 = arith.constant 1 : index
    %c2_97 = arith.constant 2 : index
    %c0_98 = arith.constant 0 : index
    %122 = vector.load %arg4[%c0_95, %c1_96, %c2_97, %c0_98] : memref<1x3x4x128xf32, #tpu.memory_space<vmem>>, vector<1x1x1x128xf32>
    %123 = vector.shape_cast %122 : vector<1x1x1x128xf32> to vector<1x128xf32>
    %124 = vector.shape_cast %121 : vector<1x128xf32> to vector<1x1x1x128xf32>
    tpu.vector_store %arg4[%c0_95, %c1_96, %c2_97, %c0_98], %124 {strides = array<i32>} : memref<1x3x4x128xf32, #tpu.memory_space<vmem>>, vector<1x1x1x128xf32>,
    %c0_99 = arith.constant 0 : index
    %c2_100 = arith.constant 2 : index
    %c2_101 = arith.constant 2 : index
    %c0_102 = arith.constant 0 : index
    %125 = vector.load %arg4[%c0_99, %c2_100, %c2_101, %c0_102] : memref<1x3x4x128xf32, #tpu.memory_space<vmem>>, vector<1x1x1x128xf32>
    %126 = vector.shape_cast %125 : vector<1x1x1x128xf32> to vector<1x128xf32>
    %cst_103 = arith.constant dense<0.000000e+00> : vector<2x128xf32>
    %127 = vector.multi_reduction <add>, %106, %cst_103 [0] : vector<1x2x128xf32> to vector<2x128xf32>
    %cst_104 = arith.constant dense<0.000000e+00> : vector<128xf32>
    %128 = vector.multi_reduction <add>, %127, %cst_104 [0] : vector<2x128xf32> to vector<128xf32>
    %129 = vector.shape_cast %128 : vector<128xf32> to vector<1x128xf32>
    %130 = arith.addf %126, %129 : vector<1x128xf32>
    %c0_105 = arith.constant 0 : index
    %c2_106 = arith.constant 2 : index
    %c2_107 = arith.constant 2 : index
    %c0_108 = arith.constant 0 : index
    %131 = vector.load %arg4[%c0_105, %c2_106, %c2_107, %c0_108] : memref<1x3x4x128xf32, #tpu.memory_space<vmem>>, vector<1x1x1x128xf32>
    %132 = vector.shape_cast %131 : vector<1x1x1x128xf32> to vector<1x128xf32>
    %133 = vector.shape_cast %130 : vector<1x128xf32> to vector<1x1x1x128xf32>
    tpu.vector_store %arg4[%c0_105, %c2_106, %c2_107, %c0_108], %133 {strides = array<i32>} : memref<1x3x4x128xf32, #tpu.memory_space<vmem>>, vector<1x1x1x128xf32>,
    %134 = vector.extract_strided_slice %14 {offsets = [0, 3, 0, 0], sizes = [1, 1, 2, 128], strides = [1, 1, 1, 1]} : vector<1x4x2x128xf32> to vector<1x1x2x128xf32>
    %135 = vector.shape_cast %134 : vector<1x1x2x128xf32> to vector<1x2x128xf32>
    %c3_i32 = arith.constant 3 : i32
    %136 = vector.broadcast %c3_i32 : i32 to vector<1x2x128xi32>
    %137 = arith.cmpi eq, %4, %136 : vector<1x2x128xi32>
    %cst_109 = arith.constant 0.000000e+00 : f32
    %138 = vector.broadcast %cst_109 : f32 to vector<1x2x128xf32>
    %139 = arith.select %137, %135, %138 : vector<1x2x128xi1>, vector<1x2x128xf32>
    %cst_110 = arith.constant 1.000000e+00 : f32
    %cst_111 = arith.constant 0.000000e+00 : f32
    %140 = vector.broadcast %cst_110 : f32 to vector<1x2x128xf32>
    %141 = vector.broadcast %cst_111 : f32 to vector<1x2x128xf32>
    %142 = arith.select %137, %140, %141 : vector<1x2x128xi1>, vector<1x2x128xf32>
    %143 = arith.mulf %135, %135 : vector<1x2x128xf32>
    %cst_112 = arith.constant 0.000000e+00 : f32
    %144 = vector.broadcast %cst_112 : f32 to vector<1x2x128xf32>
    %145 = arith.select %16, %143, %144 : vector<1x2x128xi1>, vector<1x2x128xf32>
    %c0_113 = arith.constant 0 : index
    %c0_114 = arith.constant 0 : index
    %c3 = arith.constant 3 : index
    %c0_115 = arith.constant 0 : index
    %146 = vector.load %arg4[%c0_113, %c0_114, %c3, %c0_115] : memref<1x3x4x128xf32, #tpu.memory_space<vmem>>, vector<1x1x1x128xf32>
    %147 = vector.shape_cast %146 : vector<1x1x1x128xf32> to vector<1x128xf32>
    %cst_116 = arith.constant dense<0.000000e+00> : vector<2x128xf32>
    %148 = vector.multi_reduction <add>, %139, %cst_116 [0] : vector<1x2x128xf32> to vector<2x128xf32>
    %cst_117 = arith.constant dense<0.000000e+00> : vector<128xf32>
    %149 = vector.multi_reduction <add>, %148, %cst_117 [0] : vector<2x128xf32> to vector<128xf32>
    %150 = vector.shape_cast %149 : vector<128xf32> to vector<1x128xf32>
    %151 = arith.addf %147, %150 : vector<1x128xf32>
    %c0_118 = arith.constant 0 : index
    %c0_119 = arith.constant 0 : index
    %c3_120 = arith.constant 3 : index
    %c0_121 = arith.constant 0 : index
    %152 = vector.load %arg4[%c0_118, %c0_119, %c3_120, %c0_121] : memref<1x3x4x128xf32, #tpu.memory_space<vmem>>, vector<1x1x1x128xf32>
    %153 = vector.shape_cast %152 : vector<1x1x1x128xf32> to vector<1x128xf32>
    %154 = vector.shape_cast %151 : vector<1x128xf32> to vector<1x1x1x128xf32>
    tpu.vector_store %arg4[%c0_118, %c0_119, %c3_120, %c0_121], %154 {strides = array<i32>} : memref<1x3x4x128xf32, #tpu.memory_space<vmem>>, vector<1x1x1x128xf32>,
    %c0_122 = arith.constant 0 : index
    %c1_123 = arith.constant 1 : index
    %c3_124 = arith.constant 3 : index
    %c0_125 = arith.constant 0 : index
    %155 = vector.load %arg4[%c0_122, %c1_123, %c3_124, %c0_125] : memref<1x3x4x128xf32, #tpu.memory_space<vmem>>, vector<1x1x1x128xf32>
    %156 = vector.shape_cast %155 : vector<1x1x1x128xf32> to vector<1x128xf32>
    %cst_126 = arith.constant dense<0.000000e+00> : vector<2x128xf32>
    %157 = vector.multi_reduction <add>, %142, %cst_126 [0] : vector<1x2x128xf32> to vector<2x128xf32>
    %cst_127 = arith.constant dense<0.000000e+00> : vector<128xf32>
    %158 = vector.multi_reduction <add>, %157, %cst_127 [0] : vector<2x128xf32> to vector<128xf32>
    %159 = vector.shape_cast %158 : vector<128xf32> to vector<1x128xf32>
    %160 = arith.addf %156, %159 : vector<1x128xf32>
    %c0_128 = arith.constant 0 : index
    %c1_129 = arith.constant 1 : index
    %c3_130 = arith.constant 3 : index
    %c0_131 = arith.constant 0 : index
    %161 = vector.load %arg4[%c0_128, %c1_129, %c3_130, %c0_131] : memref<1x3x4x128xf32, #tpu.memory_space<vmem>>, vector<1x1x1x128xf32>
    %162 = vector.shape_cast %161 : vector<1x1x1x128xf32> to vector<1x128xf32>
    %163 = vector.shape_cast %160 : vector<1x128xf32> to vector<1x1x1x128xf32>
    tpu.vector_store %arg4[%c0_128, %c1_129, %c3_130, %c0_131], %163 {strides = array<i32>} : memref<1x3x4x128xf32, #tpu.memory_space<vmem>>, vector<1x1x1x128xf32>,
    %c0_132 = arith.constant 0 : index
    %c2_133 = arith.constant 2 : index
    %c3_134 = arith.constant 3 : index
    %c0_135 = arith.constant 0 : index
    %164 = vector.load %arg4[%c0_132, %c2_133, %c3_134, %c0_135] : memref<1x3x4x128xf32, #tpu.memory_space<vmem>>, vector<1x1x1x128xf32>
    %165 = vector.shape_cast %164 : vector<1x1x1x128xf32> to vector<1x128xf32>
    %cst_136 = arith.constant dense<0.000000e+00> : vector<2x128xf32>
    %166 = vector.multi_reduction <add>, %145, %cst_136 [0] : vector<1x2x128xf32> to vector<2x128xf32>
    %cst_137 = arith.constant dense<0.000000e+00> : vector<128xf32>
    %167 = vector.multi_reduction <add>, %166, %cst_137 [0] : vector<2x128xf32> to vector<128xf32>
    %168 = vector.shape_cast %167 : vector<128xf32> to vector<1x128xf32>
    %169 = arith.addf %165, %168 : vector<1x128xf32>
    %c0_138 = arith.constant 0 : index
    %c2_139 = arith.constant 2 : index
    %c3_140 = arith.constant 3 : index
    %c0_141 = arith.constant 0 : index
    %170 = vector.load %arg4[%c0_138, %c2_139, %c3_140, %c0_141] : memref<1x3x4x128xf32, #tpu.memory_space<vmem>>, vector<1x1x1x128xf32>
    %171 = vector.shape_cast %170 : vector<1x1x1x128xf32> to vector<1x128xf32>
    %172 = vector.shape_cast %169 : vector<1x128xf32> to vector<1x1x1x128xf32>
    tpu.vector_store %arg4[%c0_138, %c2_139, %c3_140, %c0_141], %172 {strides = array<i32>} : memref<1x3x4x128xf32, #tpu.memory_space<vmem>>, vector<1x1x1x128xf32>,
    return
  }
  func.func @transform_0(%arg0: i32, %arg1: i32) -> (i32, i32, i32, i32) {
    %c0_i32 = arith.constant 0 : i32
    %c0_i32_0 = arith.constant 0 : i32
    %c0_i32_1 = arith.constant 0 : i32
    return %arg0, %c0_i32, %arg1, %c0_i32_0 : i32, i32, i32, i32
  }
  func.func @transform_1(%arg0: i32, %arg1: i32) -> (i32, i32, i32) {
    %c0_i32 = arith.constant 0 : i32
    %c0_i32_0 = arith.constant 0 : i32
    return %arg0, %arg1, %c0_i32 : i32, i32, i32
  }
  func.func @transform_2(%arg0: i32, %arg1: i32) -> (i32, i32, i32, i32) {
    %c0_i32 = arith.constant 0 : i32
    %c0_i32_0 = arith.constant 0 : i32
    %c0_i32_1 = arith.constant 0 : i32
    %c0_i32_2 = arith.constant 0 : i32
    return %arg0, %c0_i32, %c0_i32_0, %c0_i32_1 : i32, i32, i32, i32
  }
}

</mosaic_0001>

<llo_original>
// kernel: tpu_custom_call.1
$region0: #{tpu_custom_call.1}
  #allocation0 [shape = 'u32[]', space=smem, size = 0x4, offset = 0x4, fixed_abs, tag = 'smem constant byte address 0x4 - core index']
  #allocation1 [shape = 'u32[144,128]{1,0:T(1,128)}', space=vmem, size = 0x12000, scoped, tag = 'internal scratch']
  %s0 = inlined_call_operand.hbm [shape: f32[2,4,2,128], index: 0, kind: input, shape index: {}]
  %s1 = inlined_call_operand.hbm [shape: s32[2,2,128], index: 1, kind: input, shape index: {}]
  %s2 = inlined_call_operand.hbm [shape: f32[2,3,4,128], index: 2, kind: output, shape index: {}]
  %s3 = sld [smem:[#allocation0]]
  $region53: #{tpu_custom_call.1} parent=0
    _
  %s5 = ssub.s32 1, %s3
  %s6 = scalar_select 0, %s5, %s3
  $region1: #{tpu_custom_call.1} parent=0
    #allocation2 [shape = 'u8[8192]{0}', space=vmem, size = 0x2000, scoped, tag = 'input window, operand 0']
    #allocation3 [shape = 's32[2]{0}', space=sflag, size = 0x8, scoped, tag = 'scoped memory for tpu_custom_call.1']
    #allocation4 [shape = 's32[2]{0}', space=sflag, size = 0x8, scoped, tag = 'scoped memory for tpu_custom_call.1']
    #allocation5 [shape = 'u8[2048]{0}', space=vmem, size = 0x800, scoped, tag = 'input window, operand 1']
    #allocation6 [shape = 's32[2]{0}', space=sflag, size = 0x8, scoped, tag = 'scoped memory for tpu_custom_call.1']
    #allocation7 [shape = 'u8[12288]{0}', space=vmem, size = 0x3000, scoped, tag = 'output window, operand 0']
    %7 = vsyncpa [#allocation3], 0
    %s8 = scalar_lea.sflag [#allocation3], 1
    %9 = vsyncpa %s8, 0
    %10 = vsyncpa [#allocation6], 0
    %s11 = scalar_lea.sflag [#allocation6], 1
    %12 = vsyncpa %s11, 0
    %13 = vsyncpa [#allocation4], 0
    %s14 = scalar_lea.sflag [#allocation4], 1
    %15 = vsyncpa %s14, 0
    loop: start=0, step=1, limit=4
    $region2: #{tpu_custom_call.1} parent=1 // loop_pre_header
      _
    $region3: #{tpu_custom_call.1} parent=1 // loop_header
      %s17 = sphi 0, %s21
      %p18 = scmp.ge.s32.totalorder %s17, 4
      %s24 = sphi 0, %s36
      %s25 = sphi 0, %s32
      %s26 = sphi 0, %s24
      %s27 = sphi 0, %s25
      %s28 = sphi 0, %s26
      %s29 = sphi 0, %s27
      %s41 = sphi 0, %s43
      %s44 = sphi 0, %s41
      %s45 = sphi 0, %s44
      %s61 = sphi 0, %s45
      %s69 = sphi 0, %s71
      %s72 = sphi 0, %s69
      %s73 = sphi 0, %s72
      %s89 = sphi 0, %s73
      %s95 = sphi 0, %s97
      %s98 = sphi 0, %s95
      %s99 = sphi 0, %s98
      %s115 = sphi 0, %s99
    $region4: #{tpu_custom_call.1} parent=1 // loop_header_branch
      %20 = sbr.rel (%p18) target = $region8
    $region5: #{tpu_custom_call.1} parent=1 // loop_body
      %s22 = ssub.s32 %s17, 1
      %s23 = ssub.s32 %s17, 2
      %s30 = sadd.s32 1, %s25
      %p31 = scmp.ge.s32.totalorder %s30, 1
      %s32 = scalar_select %p31, 0, %s30
      %s33 = sadd.s32 1, %s24
      %s34 = scalar_select %p31, %s33, %s24
      %p35 = scmp.ge.s32.totalorder %s34, 2
      %s36 = scalar_select %p35, 0, %s34
      %s37 = ssub.s32 %s24, %s36
      %s38 = ssub.s32 %s25, %s32
      %s39 = sor.u32 %s37, %s38
      %p40 = scmp.eq.s32.totalorder %s39, 0
      %s42 = sadd.s32 %s41, 1
      %s43 = scalar_select %p40, %s41, %s42
      %p46 = pneg %p40
      %p47 = scmp.eq.s32.totalorder %s17, 1
      %p48 = por %p46, %p47
      %p49 = scmp.ne.s32.totalorder %s41, %s44
      %p50 = scmp.eq.s32.totalorder %s17, 0
      %p51 = por %p49, %p50
      %p52 = scmp.ne.s32.totalorder %s41, %s44
      %p53 = scmp.eq.s32.totalorder %s22, 1
      %p54 = por %p52, %p53
      %p55 = scmp.ne.s32.totalorder %s44, %s45
      %p56 = scmp.eq.s32.totalorder %s22, 0
      %p57 = por %p55, %p56
      %p58 = scmp.ne.s32.totalorder %s44, %s45
      %p59 = scmp.eq.s32.totalorder %s23, 1
      %p60 = por %p58, %p59
      %p62 = scmp.ne.s32.totalorder %s45, %s61
      %p63 = scmp.eq.s32.totalorder %s23, 0
      %p64 = por %p62, %p63
      %s65 = ssub.s32 %s24, %s36
      %s66 = ssub.s32 %s25, %s32
      %s67 = sor.u32 %s65, %s66
      %p68 = scmp.eq.s32.totalorder %s67, 0
      %s70 = sadd.s32 %s69, 1
      %s71 = scalar_select %p68, %s69, %s70
      %p74 = pneg %p68
      %p75 = scmp.eq.s32.totalorder %s17, 1
      %p76 = por %p74, %p75
      %p77 = scmp.ne.s32.totalorder %s69, %s72
      %p78 = scmp.eq.s32.totalorder %s17, 0
      %p79 = por %p77, %p78
      %p80 = scmp.ne.s32.totalorder %s69, %s72
      %p81 = scmp.eq.s32.totalorder %s22, 1
      %p82 = por %p80, %p81
      %p83 = scmp.ne.s32.totalorder %s72, %s73
      %p84 = scmp.eq.s32.totalorder %s22, 0
      %p85 = por %p83, %p84
      %p86 = scmp.ne.s32.totalorder %s72, %s73
      %p87 = scmp.eq.s32.totalorder %s23, 1
      %p88 = por %p86, %p87
      %p90 = scmp.ne.s32.totalorder %s73, %s89
      %p91 = scmp.eq.s32.totalorder %s23, 0
      %p92 = por %p90, %p91
      %s93 = ssub.s32 %s24, %s36
      %p94 = scmp.eq.s32.totalorder %s93, 0
      %s96 = sadd.s32 %s95, 1
      %s97 = scalar_select %p94, %s95, %s96
      %p100 = pneg %p94
      %p101 = scmp.eq.s32.totalorder %s17, 1
      %p102 = por %p100, %p101
      %p103 = scmp.ne.s32.totalorder %s95, %s98
      %p104 = scmp.eq.s32.totalorder %s17, 0
      %p105 = por %p103, %p104
      %p106 = scmp.ne.s32.totalorder %s95, %s98
      %p107 = scmp.eq.s32.totalorder %s22, 1
      %p108 = por %p106, %p107
      %p109 = scmp.ne.s32.totalorder %s98, %s99
      %p110 = scmp.eq.s32.totalorder %s22, 0
      %p111 = por %p109, %p110
      %p112 = scmp.ne.s32.totalorder %s98, %s99
      %p113 = scmp.eq.s32.totalorder %s23, 1
      %p114 = por %p112, %p113
      %p116 = scmp.ne.s32.totalorder %s99, %s115
      %p117 = scmp.eq.s32.totalorder %s23, 0
      %p118 = por %p116, %p117
      %p119 = scmp.le.s32.totalorder 1, %s17
      %p120 = scmp.lt.s32.totalorder %s17, 3
      %p121 = pnand %p119, %p120
      %p122 = pneg %p121
      // Predicated region
      $region9: #{tpu_custom_call.1} parent=5 // pred_check
        _
      $region10: #{tpu_custom_call.1} parent=5 // pred_check_branch
        %124 = sbr.rel (%p121) target = $region12
      $region11: #{tpu_custom_call.1} parent=5 // pred_region
        %s125 = ssub.s32 %s17, 1
      $region12: #{tpu_custom_call.1} parent=5 // pred_fallthru
        _
      %p126 = scmp.lt.s32.totalorder %s17, 2
      // Predicated region
      $region13: #{tpu_custom_call.1} parent=5 // pred_check
        %p127 = pneg %p126
      $region14: #{tpu_custom_call.1} parent=5 // pred_check_branch
        %129 = sbr.rel (%p127) target = $region16
      $region15: #{tpu_custom_call.1} parent=5 // pred_region
        // Predicated region
        $region17: #{tpu_custom_call.1} parent=15 // pred_check
          %p130 = pneg %p51
        $region18: #{tpu_custom_call.1} parent=15 // pred_check_branch
          %132 = sbr.rel (%p130) target = $region20
        $region19: #{tpu_custom_call.1} parent=15 // pred_region
          %s133 = sand.u32 %s41, 1
          %s134 = scalar_lea.sflag [#allocation3], %s133
          %s135 = sand.u32 %s41, 1
          %s136 = smul.addr %s135, 8
          %s137 = scalar_lea.vmem [#allocation2], %s136
          %s139 = ssub.s32 128, 128
          %140 = vsyncadd %s134, %s139
          %s141 = smul.addr %s24, 4
          %s142 = sadd.s32 %s25, %s141
          %s143 = smul.addr %s142, 32
          %s144 = scalar_lea.hbm %s0, %s143
          %s145 = sshll.u32 %s137, 4
          %s146 = int_to_ptr.vmem [resolvable:$true] %s145
          %151 = dma.hbm_to_vmem [thread:$0]  %s144, 128, %s146, %s134, 32, 32, 2
        $region20: #{tpu_custom_call.1} parent=15 // pred_fallthru
          _
        // Predicated region
        $region21: #{tpu_custom_call.1} parent=15 // pred_check
          %p152 = pneg %p79
        $region22: #{tpu_custom_call.1} parent=15 // pred_check_branch
          %154 = sbr.rel (%p152) target = $region24
        $region23: #{tpu_custom_call.1} parent=15 // pred_region
          %s155 = sand.u32 %s69, 1
          %s156 = scalar_lea.sflag [#allocation6], %s155
          %s157 = sand.u32 %s69, 1
          %s158 = smul.addr %s157, 2
          %s159 = scalar_lea.vmem [#allocation5], %s158
          %s161 = ssub.s32 32, 32
          %162 = vsyncadd %s156, %s161
          %s163 = sadd.s32 %s25, %s24
          %s164 = smul.addr %s163, 32
          %s165 = scalar_lea.hbm %s1, %s164
          %s167 = sshll.u32 %s159, 4
          %s168 = int_to_ptr.vmem [resolvable:$true] %s167
          %170 = dma.hbm_to_vmem [thread:$0]  %s165, 32, %s168, %s156
        $region24: #{tpu_custom_call.1} parent=15 // pred_fallthru
          _
      $region16: #{tpu_custom_call.1} parent=5 // pred_fallthru
        _
      %p171 = scmp.le.s32.totalorder 1, %s17
      %p172 = scmp.lt.s32.totalorder %s17, 3
      %p173 = pnand %p171, %p172
      %p174 = pneg %p173
      // Predicated region
      $region25: #{tpu_custom_call.1} parent=5 // pred_check
        _
      $region26: #{tpu_custom_call.1} parent=5 // pred_check_branch
        %176 = sbr.rel (%p173) target = $region28
      $region27: #{tpu_custom_call.1} parent=5 // pred_region
        %s177 = ssub.s32 %s17, 1
        %s178 = sand.u32 %s44, 1
        %s179 = scalar_lea.sflag [#allocation3], %s178
        %s180 = sand.u32 %s44, 1
        %s181 = smul.addr %s180, 8
        %s182 = scalar_lea.vmem [#allocation2], %s181
        // Predicated region
        $region29: #{tpu_custom_call.1} parent=27 // pred_check
          %p183 = pneg %p57
        $region30: #{tpu_custom_call.1} parent=27 // pred_check_branch
          %185 = sbr.rel (%p183) target = $region32
        $region31: #{tpu_custom_call.1} parent=27 // pred_region
          %186 = dma.done %s179, 128
        $region32: #{tpu_custom_call.1} parent=27 // pred_fallthru
          _
        %s187 = sand.u32 %s72, 1
        %s188 = scalar_lea.sflag [#allocation6], %s187
        %s189 = sand.u32 %s72, 1
        %s190 = smul.addr %s189, 2
        %s191 = scalar_lea.vmem [#allocation5], %s190
        // Predicated region
        $region33: #{tpu_custom_call.1} parent=27 // pred_check
          %p192 = pneg %p85
        $region34: #{tpu_custom_call.1} parent=27 // pred_check_branch
          %194 = sbr.rel (%p192) target = $region36
        $region35: #{tpu_custom_call.1} parent=27 // pred_region
          %195 = dma.done %s188, 32
        $region36: #{tpu_custom_call.1} parent=27 // pred_fallthru
          _
        %s196 = sand.u32 %s44, 1
        %s197 = scalar_lea.sflag [#allocation3], %s196
        %s198 = sand.u32 %s44, 1
        %s199 = smul.addr %s198, 8
        %s200 = scalar_lea.vmem [#allocation2], %s199
        %p201 = pneg %p57
        %p202 = pneg %p54
        %s203 = sand.u32 %s72, 1
        %s204 = scalar_lea.sflag [#allocation6], %s203
        %s205 = sand.u32 %s72, 1
        %s206 = smul.addr %s205, 2
        %s207 = scalar_lea.vmem [#allocation5], %s206
        %p208 = pneg %p85
        %p209 = pneg %p82
        %p210 = pneg %p111
        %p211 = pneg %p108
        %s212 = sand.u32 %s98, 1
        %s213 = scalar_lea.sflag [#allocation4], %s212
        %s214 = sand.u32 %s98, 1
        %s215 = smul.addr %s214, 12
        %s216 = scalar_lea.vmem [#allocation7], %s215
        %p217 = scmp.eq.s32.totalorder %s27, 0
        // Predicated region
        $region37: #{tpu_custom_call.1} parent=27 // pred_check
          %p218 = pneg %p217
        $region38: #{tpu_custom_call.1} parent=27 // pred_check_branch
          %220 = sbr.rel (%p218) target = $region40
        $region39: #{tpu_custom_call.1} parent=27 // pred_region
          %221 = vst [vmem:[%s216] sm:$0xf] 0.0
          %222 = vst [vmem:[%s216 + $0x4] sm:$0xf] 0.0
          %223 = vst [vmem:[%s216 + $0x8] sm:$0xf] 0.0
        $region40: #{tpu_custom_call.1} parent=27 // pred_fallthru
          _
        %v224 = vld [vmem:[%s182] sm:$0x3]
        %v225 = vld [vmem:[%s182 + $0x2] sm:$0x3]
        %v226 = vld [vmem:[%s182 + $0x4] sm:$0x3]
        %v227 = vld [vmem:[%s182 + $0x6] sm:$0x3]
        %v228 = vld [vmem:[%s191] sm:$0x3]
        %vm229 = vcmask 1041408
        %v230 = vsel %vm229, %v224, -inf
        %v231 = vsel %vm229, %v225, -inf
        %v232 = vsel %vm229, %v226, -inf
        %v233 = vsel %vm229, %v227, -inf
        %v234 = vmax.f32 %v230, %v231
        %v235 = vmax.f32 %v232, %v233
        %v236 = vmax.f32 %v234, %v235
        %v237 = vsub.f32 %v224, %v236
        %v238 = vsub.f32 %v225, %v236
        %v239 = vsub.f32 %v226, %v236
        %v240 = vsub.f32 %v227, %v236
        %v241 = vmul.f32 %v237, 1.442695
        %v242 = vpow.pop %v241
        %v243 = vmul.f32 %v238, 1.442695
        %v244 = vpow.pop %v243
        %v245 = vmul.f32 %v239, 1.442695
        %v246 = vpow.pop %v245
        %v247 = vmul.f32 %v240, 1.442695
        %v248 = vpow.pop %v247
        %v249 = vsel %vm229, %v242, 0.0
        %v250 = vsel %vm229, %v244, 0.0
        %v251 = vadd.f32 %v249, %v250
        %v252 = vsel %vm229, %v246, 0.0
        %v253 = vadd.f32 %v251, %v252
        %v254 = vsel %vm229, %v248, 0.0
        %v255 = vadd.f32 %v253, %v254
        %v256 = vrcp.pop %v255
        %v257 = vmul.f32 %v242, %v256
        %v258 = vmul.f32 %v244, %v256
        %v259 = vmul.f32 %v246, %v256
        %v260 = vmul.f32 %v248, %v256
        %vm261 = vcmp.ne.s32.totalorder %v228, 4294967196
        %vm262 = vcmp.eq.s32.totalorder %v228, 0
        %v263 = vsel %vm262, %v257, 0.0
        %v264 = vsel %vm262, 1.0, 0.0
        %v265 = vmul.f32 %v257, %v257
        %v266 = vsel %vm261, %v265, 0.0
        %v267 = vld [vmem:[%s216] sm:$0x1]
        %v268 = vadd.f32 %v263, 0.0
        %v269 = vsel %vm229, %v268, 0.0
        %v270 = vrot.slane %v269, 4
        %v271 = vadd.f32 %v269, %v270
        %v272 = vrot.slane %v271, 2
        %v273 = vadd.f32 %v271, %v272
        %v274 = vrot.slane %v273, 1
        %v275 = vadd.f32 %v273, %v274
        %v276 = vadd.f32 %v267, %v275
        %277 = vst [vmem:[%s216] sm:$0x1] %v276
        %s278 = scalar_lea.vmem %s216, 4 [#allocation7]
        %v279 = vld [vmem:[%s278] sm:$0x1]
        %v280 = vadd.f32 %v264, 0.0
        %v281 = vsel %vm229, %v280, 0.0
        %v282 = vrot.slane %v281, 4
        %v283 = vadd.f32 %v281, %v282
        %v284 = vrot.slane %v283, 2
        %v285 = vadd.f32 %v283, %v284
        %v286 = vrot.slane %v285, 1
        %v287 = vadd.f32 %v285, %v286
        %v288 = vadd.f32 %v279, %v287
        %289 = vst [vmem:[%s278] sm:$0x1] %v288
        %s290 = scalar_lea.vmem %s216, 8 [#allocation7]
        %v291 = vld [vmem:[%s290] sm:$0x1]
        %v292 = vadd.f32 %v266, 0.0
        %v293 = vsel %vm229, %v292, 0.0
        %v294 = vrot.slane %v293, 4
        %v295 = vadd.f32 %v293, %v294
        %v296 = vrot.slane %v295, 2
        %v297 = vadd.f32 %v295, %v296
        %v298 = vrot.slane %v297, 1
        %v299 = vadd.f32 %v297, %v298
        %v300 = vadd.f32 %v291, %v299
        %301 = vst [vmem:[%s290] sm:$0x1] %v300
        %vm302 = vcmp.eq.s32.totalorder %v228, 1
        %v303 = vsel %vm302, %v258, 0.0
        %v304 = vsel %vm302, 1.0, 0.0
        %v305 = vmul.f32 %v258, %v258
        %v306 = vsel %vm261, %v305, 0.0
        %v307 = vld [vmem:[%s216 + $0x1] sm:$0x1]
        %v308 = vadd.f32 %v303, 0.0
        %v309 = vsel %vm229, %v308, 0.0
        %v310 = vrot.slane %v309, 4
        %v311 = vadd.f32 %v309, %v310
        %v312 = vrot.slane %v311, 2
        %v313 = vadd.f32 %v311, %v312
        %v314 = vrot.slane %v313, 1
        %v315 = vadd.f32 %v313, %v314
        %v316 = vadd.f32 %v307, %v315
        %317 = vst [vmem:[%s216 + $0x1] sm:$0x1] %v316
        %v318 = vld [vmem:[%s278 + $0x1] sm:$0x1]
        %v319 = vadd.f32 %v304, 0.0
        %v320 = vsel %vm229, %v319, 0.0
        %v321 = vrot.slane %v320, 4
        %v322 = vadd.f32 %v320, %v321
        %v323 = vrot.slane %v322, 2
        %v324 = vadd.f32 %v322, %v323
        %v325 = vrot.slane %v324, 1
        %v326 = vadd.f32 %v324, %v325
        %v327 = vadd.f32 %v318, %v326
        %328 = vst [vmem:[%s278 + $0x1] sm:$0x1] %v327
        %v329 = vld [vmem:[%s290 + $0x1] sm:$0x1]
        %v330 = vadd.f32 %v306, 0.0
        %v331 = vsel %vm229, %v330, 0.0
        %v332 = vrot.slane %v331, 4
        %v333 = vadd.f32 %v331, %v332
        %v334 = vrot.slane %v333, 2
        %v335 = vadd.f32 %v333, %v334
        %v336 = vrot.slane %v335, 1
        %v337 = vadd.f32 %v335, %v336
        %v338 = vadd.f32 %v329, %v337
        %339 = vst [vmem:[%s290 + $0x1] sm:$0x1] %v338
        %vm340 = vcmp.eq.s32.totalorder %v228, 2
        %v341 = vsel %vm340, %v259, 0.0
        %v342 = vsel %vm340, 1.0, 0.0
        %v343 = vmul.f32 %v259, %v259
        %v344 = vsel %vm261, %v343, 0.0
        %v345 = vld [vmem:[%s216 + $0x2] sm:$0x1]
        %v346 = vadd.f32 %v341, 0.0
        %v347 = vsel %vm229, %v346, 0.0
        %v348 = vrot.slane %v347, 4
        %v349 = vadd.f32 %v347, %v348
        %v350 = vrot.slane %v349, 2
        %v351 = vadd.f32 %v349, %v350
        %v352 = vrot.slane %v351, 1
        %v353 = vadd.f32 %v351, %v352
        %v354 = vadd.f32 %v345, %v353
        %355 = vst [vmem:[%s216 + $0x2] sm:$0x1] %v354
        %v356 = vld [vmem:[%s278 + $0x2] sm:$0x1]
        %v357 = vadd.f32 %v342, 0.0
        %v358 = vsel %vm229, %v357, 0.0
        %v359 = vrot.slane %v358, 4
        %v360 = vadd.f32 %v358, %v359
        %v361 = vrot.slane %v360, 2
        %v362 = vadd.f32 %v360, %v361
        %v363 = vrot.slane %v362, 1
        %v364 = vadd.f32 %v362, %v363
        %v365 = vadd.f32 %v356, %v364
        %366 = vst [vmem:[%s278 + $0x2] sm:$0x1] %v365
        %v367 = vld [vmem:[%s290 + $0x2] sm:$0x1]
        %v368 = vadd.f32 %v344, 0.0
        %v369 = vsel %vm229, %v368, 0.0
        %v370 = vrot.slane %v369, 4
        %v371 = vadd.f32 %v369, %v370
        %v372 = vrot.slane %v371, 2
        %v373 = vadd.f32 %v371, %v372
        %v374 = vrot.slane %v373, 1
        %v375 = vadd.f32 %v373, %v374
        %v376 = vadd.f32 %v367, %v375
        %377 = vst [vmem:[%s290 + $0x2] sm:$0x1] %v376
        %vm378 = vcmp.eq.s32.totalorder %v228, 3
        %v379 = vsel %vm378, %v260, 0.0
        %v380 = vsel %vm378, 1.0, 0.0
        %v381 = vmul.f32 %v260, %v260
        %v382 = vsel %vm261, %v381, 0.0
        %v383 = vld [vmem:[%s216 + $0x3] sm:$0x1]
        %v384 = vadd.f32 %v379, 0.0
        %v385 = vsel %vm229, %v384, 0.0
        %v386 = vrot.slane %v385, 4
        %v387 = vadd.f32 %v385, %v386
        %v388 = vrot.slane %v387, 2
        %v389 = vadd.f32 %v387, %v388
        %v390 = vrot.slane %v389, 1
        %v391 = vadd.f32 %v389, %v390
        %v392 = vadd.f32 %v383, %v391
        %393 = vst [vmem:[%s216 + $0x3] sm:$0x1] %v392
        %v394 = vld [vmem:[%s278 + $0x3] sm:$0x1]
        %v395 = vadd.f32 %v380, 0.0
        %v396 = vsel %vm229, %v395, 0.0
        %v397 = vrot.slane %v396, 4
        %v398 = vadd.f32 %v396, %v397
        %v399 = vrot.slane %v398, 2
        %v400 = vadd.f32 %v398, %v399
        %v401 = vrot.slane %v400, 1
        %v402 = vadd.f32 %v400, %v401
        %v403 = vadd.f32 %v394, %v402
        %404 = vst [vmem:[%s278 + $0x3] sm:$0x1] %v403
        %v405 = vld [vmem:[%s290 + $0x3] sm:$0x1]
        %v406 = vadd.f32 %v382, 0.0
        %v407 = vsel %vm229, %v406, 0.0
        %v408 = vrot.slane %v407, 4
        %v409 = vadd.f32 %v407, %v408
        %v410 = vrot.slane %v409, 2
        %v411 = vadd.f32 %v409, %v410
        %v412 = vrot.slane %v411, 1
        %v413 = vadd.f32 %v411, %v412
        %v414 = vadd.f32 %v405, %v413
        %415 = vst [vmem:[%s290 + $0x3] sm:$0x1] %v414
        %s416 = sand.u32 %s98, 1
        %s417 = scalar_lea.sflag [#allocation4], %s416
        %s418 = sand.u32 %s98, 1
        %s419 = smul.addr %s418, 12
        %s420 = scalar_lea.vmem [#allocation7], %s419
        // Predicated region
        $region41: #{tpu_custom_call.1} parent=27 // pred_check
          %p421 = pneg %p108
        $region42: #{tpu_custom_call.1} parent=27 // pred_check_branch
          %423 = sbr.rel (%p421) target = $region44
        $region43: #{tpu_custom_call.1} parent=27 // pred_region
          %s425 = ssub.s32 192, 192
          %426 = vsyncadd %s417, %s425
          %s427 = smul.addr %s26, 3
          %s428 = smul.addr %s427, 64
          %s429 = scalar_lea.hbm %s2, %s428
          %s430 = sshll.u32 %s420, 4
          %s431 = int_to_ptr.vmem [resolvable:$true] %s430
          %436 = dma.vmem_to_hbm [thread:$0]  %s431, 192, %s429, %s417, 64, 64, 4
        $region44: #{tpu_custom_call.1} parent=27 // pred_fallthru
          _
      $region28: #{tpu_custom_call.1} parent=5 // pred_fallthru
        _
      %p437 = scmp.le.s32.totalorder 2, %s17
      // Predicated region
      $region45: #{tpu_custom_call.1} parent=5 // pred_check
        %p438 = pneg %p437
      $region46: #{tpu_custom_call.1} parent=5 // pred_check_branch
        %440 = sbr.rel (%p438) target = $region48
      $region47: #{tpu_custom_call.1} parent=5 // pred_region
        %s441 = ssub.s32 %s17, 2
        // Predicated region
        $region49: #{tpu_custom_call.1} parent=47 // pred_check
          %p442 = pneg %p114
        $region50: #{tpu_custom_call.1} parent=47 // pred_check_branch
          %444 = sbr.rel (%p442) target = $region52
        $region51: #{tpu_custom_call.1} parent=47 // pred_region
          %s445 = sand.u32 %s99, 1
          %s446 = scalar_lea.sflag [#allocation4], %s445
          %s447 = sand.u32 %s99, 1
          %s448 = smul.addr %s447, 12
          %s449 = scalar_lea.vmem [#allocation7], %s448
          %450 = dma.done %s446, 192
        $region52: #{tpu_custom_call.1} parent=47 // pred_fallthru
          _
      $region48: #{tpu_custom_call.1} parent=5 // pred_fallthru
        _
    $region6: #{tpu_custom_call.1} parent=1 // loop_footer
      %s21 = sadd.s32 1, %s17
    $region7: #{tpu_custom_call.1} parent=1 // loop_footer_branch
      %16 = sbr.rel target = $region3
    $region8: #{tpu_custom_call.1} parent=1 // loop_exit
      _
    %451 = vsyncpa [#allocation3], 1
    %s452 = scalar_lea.sflag [#allocation3], 1
    %453 = vsyncpa %s452, 1
    %454 = vsyncpa [#allocation6], 1
    %s455 = scalar_lea.sflag [#allocation6], 1
    %456 = vsyncpa %s455, 1
    %457 = vsyncpa [#allocation4], 1
    %s458 = scalar_lea.sflag [#allocation4], 1
    %459 = vsyncpa %s458, 1

</llo_original>
